<compile_context>
chip_gen: v5e
topology: v5e:2x2
jax: 0.10.0
libtpu: 0.0.40
codegen_flags: <defaults>
</compile_context>

<pallas_src>
import functools

import jax
import jax.numpy as jnp
from jax import lax
from jax.experimental import pallas as pl
from jax.experimental.pallas import tpu as pltpu


def _round_up(n, m):
    return ((n + m - 1) // m) * m


def _conv3d_as_matrix(kernel3d, n_disc=3):
    """(n_hidden, n_hidden) matrix T with T[i, j] = conv3d(delta_i, kernel, pad=k//2)[j].

    Exactly matches F.conv3d (cross-correlation, stride 1, padding k//2) applied
    to a one-hot (1, n_disc, n_disc, n_disc) input, flattened row-major like
    `.view(B, -1)`.  Runs once at init time, not inside the kernel.
    """
    kernel3d = jnp.asarray(kernel3d, jnp.float32)
    k = kernel3d.shape[0]
    n_hidden = n_disc ** 3
    eye = jnp.eye(n_hidden, dtype=jnp.float32).reshape(
        n_hidden, 1, n_disc, n_disc, n_disc)
    w = kernel3d.reshape(1, 1, k, k, k)
    p = k // 2
    out = lax.conv_general_dilated(
        eye, w, window_strides=(1, 1, 1), padding=[(p, p)] * 3,
        dimension_numbers=("NCDHW", "OIDHW", "NCDHW"))
    return out.reshape(n_hidden, n_hidden)


def _ohsoft_kernel(xT_ref, w_ref, muT_ref, *, bounds, n_disc, mxu_dtype):
    """One batch tile, feature-major (feature, batch) layout.

    xT_ref  : (nin, tb)        f32  input features, feature on sublanes
    w_ref   : (nout, n_hidden) f32  W_eff = fc_mu.weight @ conv3d_matrix^T
    muT_ref : (nout, tb)       f32  output mu, lane-dense batch axis
    """
    nin, tb = xT_ref.shape
    n_hidden = w_ref.shape[1]

    x = xT_ref[...]                                               # (nin, tb)

    # torch.bucketize(x, bounds, right=False): digit = #boundaries strictly < x.
    # Integer digits, Python-float literals only (no captured constant arrays).
    d = (x > bounds[0]).astype(jnp.int32)
    for b in bounds[1:]:                                          # static unroll
        d = d + (x > b).astype(jnp.int32)                         # (nin, tb) int32

    # Flat row-major index inside the (n_disc,)**nin cube via Horner on sublane
    # row slices: flat = ((d0*n + d1)*n + d2) = 9*d0 + 3*d1 + d2 for n_disc=3.
    flat = d[0:1, :]                                              # (1, tb) int32
    for f in range(1, nin):
        flat = flat * n_disc + d[f:f + 1, :]

    # One-hot built lane-dense with an int32 iota match; single cast to the
    # MXU dtype.
    rows = lax.broadcasted_iota(jnp.int32, (n_hidden, tb), 0)
    onehot = (rows == flat).astype(mxu_dtype)                     # (n_hidden, tb)

    # Single fused matmul: mu^T = W_eff @ onehot  (conv3d already folded in).
    muT_ref[...] = jnp.dot(w_ref[...].astype(mxu_dtype), onehot,
                           preferred_element_type=jnp.float32)    # (nout, tb)


def ohsoft_forward(x, params, *, block_b=16384, disc_bounds=(-0.1, 0.1),
                   masked_ftrs=(), ftr_normalizer=None,
                   features_major_in=False, features_major_out=False,
                   mxu_dtype=jnp.float32):
    """Full NetContPID_OhSoft forward.  Returns (mu, sig).

    features_major_in : x is already (nin, B) -> no wrapper pad/transpose pass.
    features_major_out: return mu as the kernel's native lane-dense (nout, B)
                        slab instead of transposing back to (B, nout).
    """
    assert len(disc_bounds) >= 1
    n_disc = len(disc_bounds) + 1
    feat_axis = 0 if features_major_in else 1

    # Wrapper-side preprocessing, mirrors masked_select / ftr_normalizer.
    if len(masked_ftrs) > 0:
        keep = [i for i in range(x.shape[feat_axis]) if i not in set(masked_ftrs)]
        idx = jnp.array(keep)
        x = x[idx, :] if features_major_in else x[:, idx]
    if ftr_normalizer is not None:
        fn = jnp.asarray(ftr_normalizer, jnp.float32)
        x = x * (fn[:, None] if features_major_in else fn)

    x = x.astype(jnp.float32)
    if features_major_in:
        nin, B = x.shape
        xT = x
    else:
        B, nin = x.shape
        xT = x.T                              # single fused XLA relayout pass
    assert nin == 3, "the one-hot cube uses exactly 3 (unmasked) features"
    n_hidden = n_disc ** nin

    w_eff = params.get("w_eff")
    if w_eff is None:                         # fold conv3d into fc_mu on the fly
        w_eff = params["w_mu"] @ _conv3d_as_matrix(params["kernel3d"], n_disc).T
    w_eff = w_eff.astype(jnp.float32)
    nout = w_eff.shape[0]
    assert w_eff.shape == (nout, n_hidden)

    # Batch tile: lane axis must be a multiple of 128.  Default 16 K amortizes
    # the ~600-cycle grid-step overhead; keep >=2 tiles (when B allows) so the
    # "parallel" axis can be sharded across both v7x TensorCores.
    tb = _round_up(min(int(block_b), _round_up(B, 128)), 128)
    if _round_up(B, tb) // tb < 2 and B > 128:
        tb = _round_up(-(-B // 2), 128)
    Bp = _round_up(B, tb)
    if Bp != B:
        xT = jnp.pad(xT, ((0, 0), (0, Bp - B)))

    # VMEM budget: double-buffered x / mu streams plus ~6 (<=32, tb)-shaped f32
    # in-kernel temporaries (iota, one-hot mask, one-hot, MXU staging).
    #   v5e: default scoped limit is 16 MiB -> this raises it (128 MiB physical).
    #   v6e: 128 MiB physical; block_b up to ~32K-64K is fine with this limit.
    #   v7x: only 64 MiB physical -> keep block_b <= 32768 so this stays ~32 MiB.
    est = 2 * 2 * (nin + nout) * tb * 4 + 6 * 32 * tb * 4
    vmem_limit = int(max(32 << 20, min(96 << 20, 2 * est)))

    kernel = functools.partial(
        _ohsoft_kernel,
        bounds=tuple(float(b) for b in disc_bounds),
        n_disc=n_disc,
        mxu_dtype=mxu_dtype)

    muT = pl.pallas_call(
        kernel,
        out_shape=jax.ShapeDtypeStruct((nout, Bp), jnp.float32),
        grid=(Bp // tb,),
        in_specs=[
            pl.BlockSpec((nin, tb), lambda i: (0, i)),             # streamed x tile
            # W_eff has a constant index_map so it stays VMEM-resident; it is a
            # few hundred bytes, so the spare pipeline buffer is immaterial
            # (pl.Buffered(1) via pipeline_mode= is the knob if weights grow).
            pl.BlockSpec((nout, n_hidden), lambda i: (0, 0)),
        ],
        out_specs=pl.BlockSpec((nout, tb), lambda i: (0, i)),      # lane-dense mu slab
        compiler_params=pltpu.CompilerParams(
            dimension_semantics=("parallel",),
            vmem_limit_bytes=vmem_limit),
    )(xT, w_eff)

    if features_major_out:
        mu = muT[:, :B]                        # (nout, B), no extra relayout pass
    else:
        mu = muT[:, :B].T                      # (B, nout), torch-compatible layout
    sig = params["stdmax"]                     # (1, nout) constant, as in the module
    # TODO(synk): MultivariateNormal(mu, diag_embed(sig)) object construction has
    # no Pallas equivalent; we return its parameters (mu, sig) instead.
    return mu, sig


def init_params(key, nout, kernel3d, init_mu=0.3, init_std=0.1, out_std=0.1,
                nin=3, disc_bounds=(-0.1, 0.1)):
    """Deterministic synthetic init mirroring the PyTorch __init__ (defaults)."""
    n_disc = len(disc_bounds) + 1
    n_hidden = n_disc ** nin
    # fc_mu.weight ~ N(init_mu, init_std / nin), torch shape (nout, n_hidden), no bias
    w_mu = init_mu + (init_std / nin) * jax.random.normal(
        key, (nout, n_hidden), jnp.float32)
    stdmax = jnp.full((1, nout), out_std, jnp.float32)
    kernel3d = jnp.asarray(kernel3d, jnp.float32)
    conv_mat = _conv3d_as_matrix(kernel3d, n_disc)       # T, (n_hidden, n_hidden)
    w_eff = w_mu @ conv_mat.T                            # fc_mu ∘ conv3d folded offline
    return dict(w_mu=w_mu, stdmax=stdmax, kernel3d=kernel3d, w_eff=w_eff)


def reference_forward(x, params, disc_bounds=(-0.1, 0.1)):
    """Pure-JAX reference replicating the PyTorch forward (explicit conv3d path)."""
    B, nin = x.shape
    bounds = jnp.asarray(disc_bounds, jnp.float32)
    n_disc = bounds.shape[0] + 1
    dvec = jnp.searchsorted(bounds, x, side="left")      # == torch.bucketize
    onehot = jnp.zeros((B, 1, n_disc, n_disc, n_disc), jnp.float32)
    onehot = onehot.at[jnp.arange(B), 0, dvec[:, 0], dvec[:, 1], dvec[:, 2]].set(1.0)
    k3 = params["kernel3d"]
    k = k3.shape[0]
    p = k // 2
    x_oh = lax.conv_general_dilated(
        onehot, k3.reshape(1, 1, k, k, k), (1, 1, 1), [(p, p)] * 3,
        dimension_numbers=("NCDHW", "OIDHW", "NCDHW")).reshape(B, -1)
    mu = x_oh @ params["w_mu"].T
    return mu, params["stdmax"]


if __name__ == "__main__":
    # Small shapes consistent with the module: nin must be 3 (n_hidden = 3**3 = 27).
    B, NIN, NOUT, NKERN = 256, 3, 2, 3

    key = jax.random.PRNGKey(0)
    kx, kw = jax.random.split(key)
    # Spread samples around the +-0.1 bucket boundaries so all 27 cells are hit.
    x = 0.3 * jax.random.normal(kx, (B, NIN), jnp.float32)

    # A "soft one-hot" smoothing kernel (the module's `kernel` ctor argument).
    k1d = jnp.array([0.5, 1.0, 0.5], jnp.float32)
    kernel3d = k1d[:, None, None] * k1d[None, :, None] * k1d[None, None, :]
    kernel3d = kernel3d / jnp.sum(kernel3d)
    assert kernel3d.shape == (NKERN, NKERN, NKERN)

    params = init_params(kw, NOUT, kernel3d)

    # Torch-layout path: (B, nin) in, (B, nout) out.  The auto-tiler picks
    # tb = 128 here so the grid has 2 steps (both v7x TensorCores busy).
    mu, sig = ohsoft_forward(x, params)
    jax.block_until_ready((mu, sig))

    mu_ref, sig_ref = reference_forward(x, params)
    assert mu.shape == (B, NOUT) and sig.shape == (1, NOUT)
    assert jnp.allclose(mu, mu_ref, atol=1e-5, rtol=1e-5), "mu mismatch"
    assert jnp.allclose(sig, sig_ref), "sig mismatch"

    # Zero-relayout path (perf-review item): caller supplies feature-major x
    # and consumes the lane-dense (nout, B) mu slab -> no wrapper-side
    # pad/transpose HBM passes around the kernel.
    muT, _ = ohsoft_forward(jnp.asarray(x.T), params,
                            features_major_in=True, features_major_out=True)
    jax.block_until_ready(muT)
    assert muT.shape == (NOUT, B)
    assert jnp.allclose(muT.T, mu_ref, atol=1e-5, rtol=1e-5), "feature-major mu mismatch"

    # The module returns MultivariateNormal(mu, diag_embed(stdmax)); mu is the only
    # data-dependent parameter, sig is the constant stdmax buffer.
    print("KERNEL_OK")
</pallas_src>

<mosaic_0001>
module attributes {stable_mosaic.version = 11 : i64} {
  func.func @_ohsoft_kernel(%arg0: i32, %arg1: memref<3x128xf32, #tpu.memory_space<vmem>>, %arg2: memref<2x27xf32, #tpu.memory_space<vmem>>, %arg3: memref<2x128xf32, #tpu.memory_space<vmem>>) attributes {dimension_semantics = [#tpu.dimension_semantics<parallel>], iteration_bounds = array<i64: 2>, scalar_prefetch = 0 : i64, scratch_operands = 0 : i64, tpu.core_type = #tpu.core_type<tc>, window_params = [{transform_indices = @transform_0, window_bounds = array<i64: 3, 128>}, {pipeline_mode = #tpu.pipeline_mode<synchronous>, transform_indices = @transform_1, window_bounds = array<i64: 2, 27>}, {transform_indices = @transform_2, window_bounds = array<i64: 2, 128>}]} {
    %c0 = arith.constant 0 : index
    %c0_0 = arith.constant 0 : index
    %0 = vector.load %arg1[%c0, %c0_0] : memref<3x128xf32, #tpu.memory_space<vmem>>, vector<3x128xf32>
    %cst = arith.constant -1.000000e-01 : f32
    %1 = vector.broadcast %cst : f32 to vector<3x128xf32>
    %2 = arith.cmpf ogt, %0, %1 : vector<3x128xf32>
    %3 = arith.extui %2 : vector<3x128xi1> to vector<3x128xi32>
    %cst_1 = arith.constant 1.000000e-01 : f32
    %4 = vector.broadcast %cst_1 : f32 to vector<3x128xf32>
    %5 = arith.cmpf ogt, %0, %4 : vector<3x128xf32>
    %6 = arith.extui %5 : vector<3x128xi1> to vector<3x128xi32>
    %7 = arith.addi %3, %6 : vector<3x128xi32>
    %8 = vector.extract_strided_slice %7 {offsets = [0, 0], sizes = [1, 128], strides = [1, 1]} : vector<3x128xi32> to vector<1x128xi32>
    %c3_i32 = arith.constant 3 : i32
    %9 = vector.broadcast %c3_i32 : i32 to vector<1x128xi32>
    %10 = arith.muli %8, %9 : vector<1x128xi32>
    %11 = vector.extract_strided_slice %7 {offsets = [1, 0], sizes = [1, 128], strides = [1, 1]} : vector<3x128xi32> to vector<1x128xi32>
    %12 = arith.addi %10, %11 : vector<1x128xi32>
    %c3_i32_2 = arith.constant 3 : i32
    %13 = vector.broadcast %c3_i32_2 : i32 to vector<1x128xi32>
    %14 = arith.muli %12, %13 : vector<1x128xi32>
    %15 = vector.extract_strided_slice %7 {offsets = [2, 0], sizes = [1, 128], strides = [1, 1]} : vector<3x128xi32> to vector<1x128xi32>
    %16 = arith.addi %14, %15 : vector<1x128xi32>
    %17 = tpu.iota {dimensions = array<i32: 0>} : vector<27x128xi32>
    %18 = vector.broadcast %16 : vector<1x128xi32> to vector<27x128xi32>
    %19 = arith.cmpi eq, %17, %18 : vector<27x128xi32>
    %20 = arith.extui %19 : vector<27x128xi1> to vector<27x128xi32>
    %21 = arith.sitofp %20 : vector<27x128xi32> to vector<27x128xf32>
    %c0_3 = arith.constant 0 : index
    %c0_4 = arith.constant 0 : index
    %22 = vector.load %arg2[%c0_3, %c0_4] : memref<2x27xf32, #tpu.memory_space<vmem>>, vector<2x27xf32>
    %cst_5 = arith.constant dense<0.000000e+00> : vector<2x128xf32>
    %23 = tpu.matmul %22, %21, %cst_5 {dimension_numbers = #tpu.dot_dimension_numbers<[1], [0], [0], [1], [0, 0, 1, 1], [], []>} : vector<2x27xf32>, vector<27x128xf32>, vector<2x128xf32> -> vector<2x128xf32>
    %c0_6 = arith.constant 0 : index
    %c0_7 = arith.constant 0 : index
    %24 = vector.load %arg3[%c0_6, %c0_7] : memref<2x128xf32, #tpu.memory_space<vmem>>, vector<2x128xf32>
    tpu.vector_store %arg3[%c0_6, %c0_7], %23 {strides = array<i32>} : memref<2x128xf32, #tpu.memory_space<vmem>>, vector<2x128xf32>,
    return
  }
  func.func @transform_0(%arg0: i32) -> (i32, i32) {
    %c0_i32 = arith.constant 0 : i32
    %c0_i32_0 = arith.constant 0 : i32
    return %c0_i32, %arg0 : i32, i32
  }
  func.func @transform_1(%arg0: i32) -> (i32, i32) {
    %c0_i32 = arith.constant 0 : i32
    %c0_i32_0 = arith.constant 0 : i32
    %c0_i32_1 = arith.constant 0 : i32
    return %c0_i32, %c0_i32_0 : i32, i32
  }
  func.func @transform_2(%arg0: i32) -> (i32, i32) {
    %c0_i32 = arith.constant 0 : i32
    %c0_i32_0 = arith.constant 0 : i32
    return %c0_i32, %arg0 : i32, i32
  }
}

</mosaic_0001>

<llo_original>
// kernel: tpu_custom_call.1
$region0: #{tpu_custom_call.1}
  #allocation0 [shape = 'u32[]', space=smem, size = 0x4, offset = 0x4, fixed_abs, tag = 'smem constant byte address 0x4 - core index']
  #allocation1 [shape = 'u32[72,128]{1,0:T(1,128)}', space=vmem, size = 0x9000, scoped, tag = 'internal scratch']
  %s0 = inlined_call_operand.hbm [shape: f32[3,256], index: 0, kind: input, shape index: {}]
  %s1 = inlined_call_operand.hbm [shape: f32[2,27], index: 1, kind: input, shape index: {}]
  %s2 = inlined_call_operand.hbm [shape: f32[2,256], index: 2, kind: output, shape index: {}]
  %s3 = sld [smem:[#allocation0]]
  $region49: #{tpu_custom_call.1} parent=0
    _
  %s5 = ssub.s32 1, %s3
  %s6 = scalar_select 0, %s5, %s3
  $region1: #{tpu_custom_call.1} parent=0
    #allocation2 [shape = 'u8[4096]{0}', space=vmem, size = 0x1000, scoped, tag = 'input window, operand 0']
    #allocation3 [shape = 's32[2]{0}', space=sflag, size = 0x8, scoped, tag = 'scoped memory for tpu_custom_call.1']
    #allocation4 [shape = 's32[2]{0}', space=sflag, size = 0x8, scoped, tag = 'scoped memory for tpu_custom_call.1']
    #allocation5 [shape = 'u8[1024]{0}', space=vmem, size = 0x400, scoped, tag = 'input window, operand 1, single buffered']
    #allocation6 [shape = 's32[1]{0}', space=sflag, size = 0x4, scoped, tag = 'scoped memory for tpu_custom_call.1']
    #allocation7 [shape = 'u8[2048]{0}', space=vmem, size = 0x800, scoped, tag = 'output window, operand 0']
    %7 = vsyncpa [#allocation3], 0
    %s8 = scalar_lea.sflag [#allocation3], 1
    %9 = vsyncpa %s8, 0
    %10 = vsyncpa [#allocation6], 0
    %11 = vsyncpa [#allocation4], 0
    %s12 = scalar_lea.sflag [#allocation4], 1
    %13 = vsyncpa %s12, 0
    loop: start=0, step=1, limit=4
    $region2: #{tpu_custom_call.1} parent=1 // loop_pre_header
      _
    $region3: #{tpu_custom_call.1} parent=1 // loop_header
      %s15 = sphi 0, %s19
      %p16 = scmp.ge.s32.totalorder %s15, 4
      %s25 = sphi 0, %s27
      %s28 = sphi 0, %s25
      %s29 = sphi 0, %s28
      %s45 = sphi 0, %s29
      %s49 = sphi 0, %s49
      %s51 = sphi 0, %s49
      %s52 = sphi 0, %s51
      %s66 = sphi 0, %s52
      %s72 = sphi 0, %s74
      %s75 = sphi 0, %s72
      %s76 = sphi 0, %s75
      %s92 = sphi 0, %s76
    $region4: #{tpu_custom_call.1} parent=1 // loop_header_branch
      %18 = sbr.rel (%p16) target = $region8
    $region5: #{tpu_custom_call.1} parent=1 // loop_body
      %s20 = ssub.s32 %s15, 1
      %s21 = ssub.s32 %s15, 2
      %s22 = sadd.s32 %s15, 1
      %s23 = ssub.s32 %s15, %s22
      %p24 = scmp.eq.s32.totalorder %s23, 0
      %s26 = sadd.s32 %s25, 1
      %s27 = scalar_select %p24, %s25, %s26
      %p30 = pneg %p24
      %p31 = scmp.eq.s32.totalorder %s15, 1
      %p32 = por %p30, %p31
      %p33 = scmp.ne.s32.totalorder %s25, %s28
      %p34 = scmp.eq.s32.totalorder %s15, 0
      %p35 = por %p33, %p34
      %p36 = scmp.ne.s32.totalorder %s25, %s28
      %p37 = scmp.eq.s32.totalorder %s20, 1
      %p38 = por %p36, %p37
      %p39 = scmp.ne.s32.totalorder %s28, %s29
      %p40 = scmp.eq.s32.totalorder %s20, 0
      %p41 = por %p39, %p40
      %p42 = scmp.ne.s32.totalorder %s28, %s29
      %p43 = scmp.eq.s32.totalorder %s21, 1
      %p44 = por %p42, %p43
      %p46 = scmp.ne.s32.totalorder %s29, %s45
      %p47 = scmp.eq.s32.totalorder %s21, 0
      %p48 = por %p46, %p47
      %s50 = sadd.s32 %s49, 1
      %p53 = scmp.eq.s32.totalorder %s15, 1
      %p54 = scmp.ne.s32.totalorder %s49, %s51
      %p55 = scmp.eq.s32.totalorder %s15, 0
      %p56 = por %p54, %p55
      %p57 = scmp.ne.s32.totalorder %s49, %s51
      %p58 = scmp.eq.s32.totalorder %s20, 1
      %p59 = por %p57, %p58
      %p60 = scmp.ne.s32.totalorder %s51, %s52
      %p61 = scmp.eq.s32.totalorder %s20, 0
      %p62 = por %p60, %p61
      %p63 = scmp.ne.s32.totalorder %s51, %s52
      %p64 = scmp.eq.s32.totalorder %s21, 1
      %p65 = por %p63, %p64
      %p67 = scmp.ne.s32.totalorder %s52, %s66
      %p68 = scmp.eq.s32.totalorder %s21, 0
      %p69 = por %p67, %p68
      %s70 = ssub.s32 %s15, %s22
      %p71 = scmp.eq.s32.totalorder %s70, 0
      %s73 = sadd.s32 %s72, 1
      %s74 = scalar_select %p71, %s72, %s73
      %p77 = pneg %p71
      %p78 = scmp.eq.s32.totalorder %s15, 1
      %p79 = por %p77, %p78
      %p80 = scmp.ne.s32.totalorder %s72, %s75
      %p81 = scmp.eq.s32.totalorder %s15, 0
      %p82 = por %p80, %p81
      %p83 = scmp.ne.s32.totalorder %s72, %s75
      %p84 = scmp.eq.s32.totalorder %s20, 1
      %p85 = por %p83, %p84
      %p86 = scmp.ne.s32.totalorder %s75, %s76
      %p87 = scmp.eq.s32.totalorder %s20, 0
      %p88 = por %p86, %p87
      %p89 = scmp.ne.s32.totalorder %s75, %s76
      %p90 = scmp.eq.s32.totalorder %s21, 1
      %p91 = por %p89, %p90
      %p93 = scmp.ne.s32.totalorder %s76, %s92
      %p94 = scmp.eq.s32.totalorder %s21, 0
      %p95 = por %p93, %p94
      %p96 = scmp.le.s32.totalorder 1, %s15
      %p97 = scmp.lt.s32.totalorder %s15, 3
      %p98 = pnand %p96, %p97
      %p99 = pneg %p98
      // Predicated region
      $region9: #{tpu_custom_call.1} parent=5 // pred_check
        _
      $region10: #{tpu_custom_call.1} parent=5 // pred_check_branch
        %101 = sbr.rel (%p98) target = $region12
      $region11: #{tpu_custom_call.1} parent=5 // pred_region
        %s102 = ssub.s32 %s15, 1
        // Predicated region
        $region13: #{tpu_custom_call.1} parent=11 // pred_check
          %p103 = pneg %p62
        $region14: #{tpu_custom_call.1} parent=11 // pred_check_branch
          %105 = sbr.rel (%p103) target = $region16
        $region15: #{tpu_custom_call.1} parent=11 // pred_region
          %107 = vsyncadd [#allocation6], 0
          %s109 = sshll.u32 %s1, 4
          %s110 = int_to_ptr.hbm [resolvable:$true] %s109
          %s111 = sshll.u32 [#allocation5], 4
          %s112 = int_to_ptr.vmem [resolvable:$true] %s111
          %114 = dma.hbm_to_vmem [thread:$0]  %s110, 32, %s112, [#allocation6]
        $region16: #{tpu_custom_call.1} parent=11 // pred_fallthru
          _
      $region12: #{tpu_custom_call.1} parent=5 // pred_fallthru
        _
      %p115 = scmp.lt.s32.totalorder %s15, 2
      // Predicated region
      $region17: #{tpu_custom_call.1} parent=5 // pred_check
        %p116 = pneg %p115
      $region18: #{tpu_custom_call.1} parent=5 // pred_check_branch
        %118 = sbr.rel (%p116) target = $region20
      $region19: #{tpu_custom_call.1} parent=5 // pred_region
        // Predicated region
        $region21: #{tpu_custom_call.1} parent=19 // pred_check
          %p119 = pneg %p35
        $region22: #{tpu_custom_call.1} parent=19 // pred_check_branch
          %121 = sbr.rel (%p119) target = $region24
        $region23: #{tpu_custom_call.1} parent=19 // pred_region
          %s122 = sand.u32 %s25, 1
          %s123 = scalar_lea.sflag [#allocation3], %s122
          %s124 = sand.u32 %s25, 1
          %s125 = smul.addr %s124, 4
          %s126 = scalar_lea.vmem [#allocation2], %s125
          %128 = vsyncadd %s123, 0
          %s129 = smul.addr %s15, 4
          %s130 = scalar_lea.hbm %s0, %s129
          %s132 = sshll.u32 %s130, 4
          %s133 = int_to_ptr.hbm [resolvable:$true] %s132
          %s134 = sshll.u32 %s126, 4
          %s135 = int_to_ptr.vmem [resolvable:$true] %s134
          %137 = dma.hbm_to_vmem [thread:$0]  %s133, 64, %s135, %s123
        $region24: #{tpu_custom_call.1} parent=19 // pred_fallthru
          _
      $region20: #{tpu_custom_call.1} parent=5 // pred_fallthru
        _
      %p138 = scmp.le.s32.totalorder 1, %s15
      %p139 = scmp.lt.s32.totalorder %s15, 3
      %p140 = pnand %p138, %p139
      %p141 = pneg %p140
      // Predicated region
      $region25: #{tpu_custom_call.1} parent=5 // pred_check
        _
      $region26: #{tpu_custom_call.1} parent=5 // pred_check_branch
        %143 = sbr.rel (%p140) target = $region28
      $region27: #{tpu_custom_call.1} parent=5 // pred_region
        %s144 = ssub.s32 %s15, 1
        %s145 = sand.u32 %s28, 1
        %s146 = scalar_lea.sflag [#allocation3], %s145
        %s147 = sand.u32 %s28, 1
        %s148 = smul.addr %s147, 4
        %s149 = scalar_lea.vmem [#allocation2], %s148
        // Predicated region
        $region29: #{tpu_custom_call.1} parent=27 // pred_check
          %p150 = pneg %p41
        $region30: #{tpu_custom_call.1} parent=27 // pred_check_branch
          %152 = sbr.rel (%p150) target = $region32
        $region31: #{tpu_custom_call.1} parent=27 // pred_region
          %154 = dma.done %s146, 64
        $region32: #{tpu_custom_call.1} parent=27 // pred_fallthru
          _
        // Predicated region
        $region33: #{tpu_custom_call.1} parent=27 // pred_check
          %p155 = pneg %p62
        $region34: #{tpu_custom_call.1} parent=27 // pred_check_branch
          %157 = sbr.rel (%p155) target = $region36
        $region35: #{tpu_custom_call.1} parent=27 // pred_region
          %159 = dma.done [#allocation6], 32
        $region36: #{tpu_custom_call.1} parent=27 // pred_fallthru
          _
        %s160 = sand.u32 %s28, 1
        %s161 = scalar_lea.sflag [#allocation3], %s160
        %s162 = sand.u32 %s28, 1
        %s163 = smul.addr %s162, 4
        %s164 = scalar_lea.vmem [#allocation2], %s163
        %p165 = pneg %p41
        %p166 = pneg %p38
        %p167 = pneg %p62
        %p168 = pneg %p59
        %p169 = pneg %p88
        %p170 = pneg %p85
        %s171 = sand.u32 %s75, 1
        %s172 = scalar_lea.sflag [#allocation4], %s171
        %s173 = sand.u32 %s75, 1
        %s174 = smul.addr %s173, 2
        %s175 = scalar_lea.vmem [#allocation7], %s174
        %v176 = vld [vmem:[%s149] sm:$0x7]
        %vm177 = vcmp.gt.f32.partialorder %v176, -0.1
        %v178 = vsel %vm177, 1, 0
        %vm179 = vcmp.gt.f32.partialorder %v176, 0.1
        %v180 = vsel %vm179, 1, 0
        %v181 = vadd.s32 %v178, %v180
        %v182 = vmul.u32 %v181, 3
        %v183 = vrot.slane %v181, 1
        %v184 = vadd.s32 %v182, %v183
        %v185 = vmul.u32 %v184, 3
        %v186 = vrot.slane %v181, 2
        %v187 = vadd.s32 %v185, %v186
        %v188 = vlaneseq
        %v189 = vshrl.u32 %v188, 7
        %v190 = vadd.s32 %v189, 8
        %v191 = vadd.s32 %v189, 16
        %v192 = vadd.s32 %v189, 24
        %v193 = vperm.slane %v187, 0
        %vm194 = vcmp.eq.s32.totalorder %v189, %v193
        %vm195 = vcmp.eq.s32.totalorder %v190, %v193
        %vm196 = vcmp.eq.s32.totalorder %v191, %v193
        %vm197 = vcmp.eq.s32.totalorder %v192, %v193
        %v198 = vsel %vm194, 1, 0
        %v199 = vsel %vm195, 1, 0
        %v200 = vsel %vm196, 1, 0
        %v201 = vsel %vm197, 1, 0
        %v202 = vcvt.s32.f32 %v198
        %v203 = vcvt.s32.f32 %v199
        %v204 = vcvt.s32.f32 %v200
        %v205 = vcvt.s32.f32 %v201
        %v206 = vld [vmem:[#allocation5] sm:$0x3]
        %vm207 = vcmask 220160
        %v209 = vsel %vm207, %v206, 0
        %vm211 = vcmask 1042432
        %v213 = vsel %vm211, %v205, 0
        %215 = vmatpush.msra.mxu0 0.0
        %216 = vmatpush.msra.mxu0 0.0
        %217 = vmatpush.msra.mxu0 0.0
        %218 = vmatpush.msra.mxu0 0.0
        %219 = vmatpush.msra.mxu0 0.0
        %220 = vmatpush.msra.mxu0 0.0
        %221 = vmatpush.msra.mxu0 0.0
        %222 = vmatpush.msra.mxu0 0.0
        %223 = vmatpush.msra.mxu0 0.0
        %224 = vmatpush.msra.mxu0 0.0
        %225 = vmatpush.msra.mxu0 0.0
        %226 = vmatpush.msra.mxu0 0.0
        %227 = vmatpush.msra.mxu0 %v213
        %228 = vmatpush.msra.mxu0 %v204
        %229 = vmatpush.msra.mxu0 %v203
        %230 = vmatpush.msra.mxu0 %v202
        %231 = vmatmul.f32.gmra.mxu0 %v209
        %v232 = vpop.f32.mrf.mxu0
        %v233 = vadd.f32 0.0, %v232
        %234 = vdwg.mxu0
        %235 = vst [vmem:[%s175] sm:$0x3] %v233
        %s236 = sand.u32 %s75, 1
        %s237 = scalar_lea.sflag [#allocation4], %s236
        %s238 = sand.u32 %s75, 1
        %s239 = smul.addr %s238, 2
        %s240 = scalar_lea.vmem [#allocation7], %s239
        // Predicated region
        $region37: #{tpu_custom_call.1} parent=27 // pred_check
          %p241 = pneg %p85
        $region38: #{tpu_custom_call.1} parent=27 // pred_check_branch
          %243 = sbr.rel (%p241) target = $region40
        $region39: #{tpu_custom_call.1} parent=27 // pred_region
          %245 = vsyncadd %s237, 0
          %s246 = smul.addr %s20, 2
          %s247 = scalar_lea.hbm %s2, %s246
          %s249 = sshll.u32 %s240, 4
          %s250 = int_to_ptr.vmem [resolvable:$true] %s249
          %s251 = sshll.u32 %s247, 4
          %s252 = int_to_ptr.hbm [resolvable:$true] %s251
          %254 = dma.vmem_to_hbm [thread:$0]  %s250, 32, %s252, %s237
        $region40: #{tpu_custom_call.1} parent=27 // pred_fallthru
          _
      $region28: #{tpu_custom_call.1} parent=5 // pred_fallthru
        _
      %p255 = scmp.le.s32.totalorder 2, %s15
      // Predicated region
      $region41: #{tpu_custom_call.1} parent=5 // pred_check
        %p256 = pneg %p255
      $region42: #{tpu_custom_call.1} parent=5 // pred_check_branch
        %258 = sbr.rel (%p256) target = $region44
      $region43: #{tpu_custom_call.1} parent=5 // pred_region
        %s259 = ssub.s32 %s15, 2
        // Predicated region
        $region45: #{tpu_custom_call.1} parent=43 // pred_check
          %p260 = pneg %p91
        $region46: #{tpu_custom_call.1} parent=43 // pred_check_branch
          %262 = sbr.rel (%p260) target = $region48
        $region47: #{tpu_custom_call.1} parent=43 // pred_region
          %s263 = sand.u32 %s76, 1
          %s264 = scalar_lea.sflag [#allocation4], %s263
          %s265 = sand.u32 %s76, 1
          %s266 = smul.addr %s265, 2
          %s267 = scalar_lea.vmem [#allocation7], %s266
          %269 = dma.done %s264, 32
        $region48: #{tpu_custom_call.1} parent=43 // pred_fallthru
          _
      $region44: #{tpu_custom_call.1} parent=5 // pred_fallthru
        _
    $region6: #{tpu_custom_call.1} parent=1 // loop_footer
      %s19 = sadd.s32 1, %s15
    $region7: #{tpu_custom_call.1} parent=1 // loop_footer_branch
      %14 = sbr.rel target = $region3
    $region8: #{tpu_custom_call.1} parent=1 // loop_exit
      _
    %270 = vsyncpa [#allocation3], 1
    %s271 = scalar_lea.sflag [#allocation3], 1
    %272 = vsyncpa %s271, 1
    %273 = vsyncpa [#allocation6], 1
    %274 = vsyncpa [#allocation4], 1
    %s275 = scalar_lea.sflag [#allocation4], 1
    %276 = vsyncpa %s275, 1

</llo_original>
